<compile_context>
chip_gen: v7x
topology: tpu7x:2x2x1
jax: 0.10.0
libtpu: 0.0.40
codegen_flags: <defaults>
</compile_context>

<pallas_src>
import jax
import jax.numpy as jnp
import numpy as np
from jax.experimental import pallas as pl
from jax.experimental.pallas import tpu as pltpu


# ---------------------------------------------------------------------------
# Pallas kernels
# ---------------------------------------------------------------------------
def _affine_lanes_kernel(xt_ref, wt_ref, b_ref, o_ref):
    """Lane-dense affine map in transposed layout (VPU only, no MXU).

    xt_ref: (K, tm)      -- samples along lanes
    wt_ref: (n_out, K)   -- folded weight, transposed
    b_ref : (n_out, 1)   -- folded bias
    o_ref : (n_out, tm)  -- transposed logits (lane-dense store)

    o[c, :] = sum_k wt[c, k] * xt[k, :] + b[c]
    K is tiny by construction (input_dim after folding), so a (tm,K)@(K,n_out)
    MXU matmul would leave the systolic array ~99% idle; broadcast FMAs on the
    VALU are cheaper and keep the vector-extended slot free.
    """
    k_dim = xt_ref.shape[0]
    acc = jnp.broadcast_to(b_ref[...], o_ref.shape).astype(jnp.float32)
    for k in range(k_dim):  # static unroll; k_dim is small (e.g. 2)
        acc = acc + wt_ref[:, k:k + 1] * xt_ref[k:k + 1, :]
    o_ref[...] = acc.astype(o_ref.dtype)


def _affine_mxu_kernel(x_ref, w_ref, b_ref, o_ref):
    """Fallback for large input_dim: row-blocked y = x @ W + b on the MXU."""
    o_ref[...] = (
        jnp.dot(x_ref[...], w_ref[...], preferred_element_type=jnp.float32)
        + b_ref[...]
    ).astype(o_ref.dtype)


# ---------------------------------------------------------------------------
# Wrapper
# ---------------------------------------------------------------------------
_FMA_K_MAX = 32       # use the VPU path whenever the contraction dim is tiny
_MAX_COL_TILE = 4096  # samples (lanes) per grid step on the VPU path
_MAX_ROW_TILE = 1024  # rows per grid step on the MXU fallback path


def _round_up(x, m):
    return ((x + m - 1) // m) * m


def _fold_params(params):
    """Fold the (activation-free) linear stack into a single affine map."""
    w = params["w1"].astype(jnp.float32)
    b = params["b1"].astype(jnp.float32)
    if "w2" in params:
        w2 = params["w2"].astype(jnp.float32)
        b2 = params["b2"].astype(jnp.float32)
        w = w @ w2            # (in, n_classes)
        b = b @ w2 + b2       # (n_classes,)
    return w, b


def _pick_col_tile(n):
    """Largest lane-dense tile <= _MAX_COL_TILE; >=2 grid steps for big N
    so the row axis can shard across v7x's two TensorCores."""
    n_lane = _round_up(max(n, 1), 128)
    if n_lane <= _MAX_COL_TILE:
        return n_lane
    steps = pl.cdiv(n_lane, _MAX_COL_TILE)
    return _round_up(pl.cdiv(n_lane, steps), 128)


def _forward_lanes(xf, w, b, n, k_dim, n_out):
    tm = _pick_col_tile(n)
    n_pad = _round_up(n, tm)
    grid = (n_pad // tm,)

    xt = xf.T                                    # (K, N): lane-dense layout
    if n_pad != n:
        xt = jnp.pad(xt, ((0, 0), (0, n_pad - n)))
    wt = w.T                                     # (n_out, K)
    bc = b.reshape(n_out, 1)

    out_t = pl.pallas_call(
        _affine_lanes_kernel,
        out_shape=jax.ShapeDtypeStruct((n_out, n_pad), jnp.float32),
        grid=grid,
        in_specs=[
            pl.BlockSpec((k_dim, tm), lambda i: (0, i)),
            pl.BlockSpec((n_out, k_dim), lambda i: (0, 0)),
            pl.BlockSpec((n_out, 1), lambda i: (0, 0)),
        ],
        out_specs=pl.BlockSpec((n_out, tm), lambda i: (0, i)),
        compiler_params=pltpu.CompilerParams(
            dimension_semantics=("parallel",)),
    )(xt, wt, bc)

    return out_t[:, :n].T                        # back to (N, n_out)


def _forward_mxu(xf, w, b, n, k_dim, n_out):
    # Keep the x block around ~2 MB so double-buffering fits v5e's 16 MiB
    # default scoped VMEM even for large input_dim.
    tm_cap = max(8, ((2 << 20) // (k_dim * 4)) // 8 * 8)
    tm = min(_MAX_ROW_TILE, tm_cap, _round_up(max(n, 1), 8))
    n_pad = _round_up(n, tm)
    grid = (n_pad // tm,)
    if n_pad != n:
        xf = jnp.pad(xf, ((0, n_pad - n), (0, 0)))
    bb = b.reshape(1, n_out)

    out = pl.pallas_call(
        _affine_mxu_kernel,
        out_shape=jax.ShapeDtypeStruct((n_pad, n_out), jnp.float32),
        grid=grid,
        in_specs=[
            pl.BlockSpec((tm, k_dim), lambda i: (i, 0)),
            pl.BlockSpec((k_dim, n_out), lambda i: (0, 0)),
            pl.BlockSpec((1, n_out), lambda i: (0, 0)),
        ],
        out_specs=pl.BlockSpec((tm, n_out), lambda i: (i, 0)),
        compiler_params=pltpu.CompilerParams(
            dimension_semantics=("parallel",)),
    )(xf, w, bb)
    return out[:n]


def mlp_two_moons_forward(x, params):
    """Forward pass of MLPTwoMoonsRA.

    params: dict with keys
      'w1': (in, hidden_or_classes)  'b1': (hidden_or_classes,)
      and optionally 'w2': (hidden, n_classes), 'b2': (n_classes,)
    Returns logits of shape (N, n_classes), N = prod(x.shape[:-?]) / input_dim.
    """
    w, b = _fold_params(params)                  # (K, n_out), (n_out,)
    k_dim, n_out = w.shape
    xf = jnp.asarray(x, jnp.float32).reshape(-1, k_dim)  # torch: x.reshape(-1, D)
    n = xf.shape[0]

    if k_dim <= _FMA_K_MAX:
        return _forward_lanes(xf, w, b, n, k_dim, n_out)
    return _forward_mxu(xf, w, b, n, k_dim, n_out)


# ---------------------------------------------------------------------------
# Deterministic parameter init (mimics nn.Linear's uniform(-1/sqrt(in), ...))
# ---------------------------------------------------------------------------
def init_params(key, input_dim, hidden_dim, n_classes, n_layers):
    ks = jax.random.split(key, 4)

    def linear(kw, kb, fan_in, fan_out):
        bound = 1.0 / np.sqrt(fan_in)
        w = jax.random.uniform(kw, (fan_in, fan_out), jnp.float32, -bound, bound)
        b = jax.random.uniform(kb, (fan_out,), jnp.float32, -bound, bound)
        return w, b

    if n_layers < 2:
        w1, b1 = linear(ks[0], ks[1], input_dim, n_classes)
        return {"w1": w1, "b1": b1}
    w1, b1 = linear(ks[0], ks[1], input_dim, hidden_dim)
    w2, b2 = linear(ks[2], ks[3], hidden_dim, n_classes)
    return {"w1": w1, "b1": b1, "w2": w2, "b2": b2}


def reference_forward(x, params):
    """Pure-JAX reference: sequential (unfolded) linears, like the PyTorch net."""
    xf = jnp.asarray(x, jnp.float32).reshape(-1, params["w1"].shape[0])
    h = xf @ params["w1"] + params["b1"]
    if "w2" in params:
        h = h @ params["w2"] + params["b2"]
    return h


if __name__ == "__main__":
    key = jax.random.PRNGKey(0)
    kx, kp1, kp2, kx3, kp3 = jax.random.split(key, 5)

    # Two-moons style input: input_dim=2, extra leading dims flattened by the
    # forward exactly like torch's x.reshape(-1, input_dim).
    input_dim, hidden_dim, n_classes = 2, 32, 2
    x = jax.random.normal(kx, (16, 4, input_dim), dtype=jnp.float32)  # -> (64, 2)

    # Case 1: module defaults (n_layers=1) -> single Linear(2, 2), VPU path.
    p1 = init_params(kp1, input_dim, hidden_dim, n_classes, n_layers=1)
    out1 = jax.block_until_ready(mlp_two_moons_forward(x, p1))
    ref1 = reference_forward(x, p1)
    np.testing.assert_allclose(np.asarray(out1), np.asarray(ref1),
                               rtol=1e-4, atol=1e-5)
    assert out1.shape == (64, n_classes)

    # Case 2: n_layers=2 -> Linear(2,32) then Linear(32,2), folded to one
    # affine map in the wrapper, VPU path.
    p2 = init_params(kp2, input_dim, hidden_dim, n_classes, n_layers=2)
    out2 = jax.block_until_ready(mlp_two_moons_forward(x, p2))
    ref2 = reference_forward(x, p2)
    np.testing.assert_allclose(np.asarray(out2), np.asarray(ref2),
                               rtol=1e-4, atol=1e-5)
    assert out2.shape == (64, n_classes)

    # Case 3: wide input_dim exercises the MXU fallback path (and padding of a
    # non-multiple row count).
    wide_in = 128
    x3 = jax.random.normal(kx3, (5, 7, wide_in), dtype=jnp.float32)  # -> (35, 128)
    p3 = init_params(kp3, wide_in, 64, n_classes, n_layers=2)
    out3 = jax.block_until_ready(mlp_two_moons_forward(x3, p3))
    ref3 = reference_forward(x3, p3)
    np.testing.assert_allclose(np.asarray(out3), np.asarray(ref3),
                               rtol=1e-4, atol=1e-5)
    assert out3.shape == (35, n_classes)

    print("KERNEL_OK")
</pallas_src>

<mosaic_0001>
module attributes {stable_mosaic.version = 11 : i64} {
  func.func @_affine_lanes_kernel(%arg0: i32, %arg1: memref<2x128xf32, #tpu.memory_space<vmem>>, %arg2: memref<2x2xf32, #tpu.memory_space<vmem>>, %arg3: memref<2x1xf32, #tpu.memory_space<vmem>>, %arg4: memref<2x128xf32, #tpu.memory_space<vmem>>) attributes {dimension_semantics = [#tpu.dimension_semantics<parallel>], iteration_bounds = array<i64: 1>, scalar_prefetch = 0 : i64, scratch_operands = 0 : i64, tpu.core_type = #tpu.core_type<tc>, window_params = [{transform_indices = @transform_0, window_bounds = array<i64: 2, 128>}, {pipeline_mode = #tpu.pipeline_mode<synchronous>, transform_indices = @transform_1, window_bounds = array<i64: 2, 2>}, {pipeline_mode = #tpu.pipeline_mode<synchronous>, transform_indices = @transform_2, window_bounds = array<i64: 2, 1>}, {transform_indices = @transform_3, window_bounds = array<i64: 2, 128>}]} {
    %c0 = arith.constant 0 : index
    %c0_0 = arith.constant 0 : index
    %0 = vector.load %arg3[%c0, %c0_0] : memref<2x1xf32, #tpu.memory_space<vmem>>, vector<2x1xf32>
    %1 = vector.shape_cast %0 : vector<2x1xf32> to vector<2x1xf32>
    %2 = vector.broadcast %1 : vector<2x1xf32> to vector<2x128xf32>
    %c0_1 = arith.constant 0 : index
    %c0_2 = arith.constant 0 : index
    %3 = vector.load %arg2[%c0_1, %c0_2] : memref<2x2xf32, #tpu.memory_space<vmem>>, vector<2x1xf32>
    %c0_3 = arith.constant 0 : index
    %c0_4 = arith.constant 0 : index
    %4 = vector.load %arg1[%c0_3, %c0_4] : memref<2x128xf32, #tpu.memory_space<vmem>>, vector<1x128xf32>
    %5 = vector.broadcast %3 : vector<2x1xf32> to vector<2x128xf32>
    %6 = vector.broadcast %4 : vector<1x128xf32> to vector<2x128xf32>
    %7 = arith.mulf %5, %6 : vector<2x128xf32>
    %8 = arith.addf %2, %7 : vector<2x128xf32>
    %c0_5 = arith.constant 0 : index
    %c1 = arith.constant 1 : index
    %9 = vector.load %arg2[%c0_5, %c1] : memref<2x2xf32, #tpu.memory_space<vmem>>, vector<2x1xf32>
    %c1_6 = arith.constant 1 : index
    %c0_7 = arith.constant 0 : index
    %10 = vector.load %arg1[%c1_6, %c0_7] : memref<2x128xf32, #tpu.memory_space<vmem>>, vector<1x128xf32>
    %11 = vector.broadcast %9 : vector<2x1xf32> to vector<2x128xf32>
    %12 = vector.broadcast %10 : vector<1x128xf32> to vector<2x128xf32>
    %13 = arith.mulf %11, %12 : vector<2x128xf32>
    %14 = arith.addf %8, %13 : vector<2x128xf32>
    %c0_8 = arith.constant 0 : index
    %c0_9 = arith.constant 0 : index
    %15 = vector.load %arg4[%c0_8, %c0_9] : memref<2x128xf32, #tpu.memory_space<vmem>>, vector<2x128xf32>
    tpu.vector_store %arg4[%c0_8, %c0_9], %14 {strides = array<i32>} : memref<2x128xf32, #tpu.memory_space<vmem>>, vector<2x128xf32>,
    return
  }
  func.func @transform_0(%arg0: i32) -> (i32, i32) {
    %c0_i32 = arith.constant 0 : i32
    %c0_i32_0 = arith.constant 0 : i32
    return %c0_i32, %arg0 : i32, i32
  }
  func.func @transform_1(%arg0: i32) -> (i32, i32) {
    %c0_i32 = arith.constant 0 : i32
    %c0_i32_0 = arith.constant 0 : i32
    %c0_i32_1 = arith.constant 0 : i32
    return %c0_i32, %c0_i32_0 : i32, i32
  }
  func.func @transform_2(%arg0: i32) -> (i32, i32) {
    %c0_i32 = arith.constant 0 : i32
    %c0_i32_0 = arith.constant 0 : i32
    %c0_i32_1 = arith.constant 0 : i32
    return %c0_i32, %c0_i32_0 : i32, i32
  }
  func.func @transform_3(%arg0: i32) -> (i32, i32) {
    %c0_i32 = arith.constant 0 : i32
    %c0_i32_0 = arith.constant 0 : i32
    return %c0_i32, %arg0 : i32, i32
  }
}

</mosaic_0001>

<llo_original>
// kernel: tpu_custom_call.1
$region0: #{tpu_custom_call.1}
  #allocation0 [shape = 'u32[]', space=smem, size = 0x4, offset = 0x4, fixed_abs, tag = 'smem constant byte address 0x4 - core index']
  #allocation1 [shape = 'u32[144,128]{1,0:T(1,128)}', space=vmem, size = 0x12000, scoped, tag = 'internal scratch']
  %s0 = inlined_call_operand.vmem [shape: f32[2,128], index: 0, kind: input, shape index: {}]
  %s1 = inlined_call_operand.vmem [shape: f32[2,2], index: 1, kind: input, shape index: {}]
  %s2 = inlined_call_operand.vmem [shape: f32[2,1], index: 2, kind: input, shape index: {}]
  %s3 = inlined_call_operand.hbm [shape: f32[2,128], index: 3, kind: output, shape index: {}]
  %s4 = sld [smem:[#allocation0]]
  $region22: #{tpu_custom_call.1} parent=0
    _
  %s6 = ssub.s32 1, %s4
  %s7 = scalar_select 0, %s6, %s4
  $region1: #{tpu_custom_call.1} parent=0
    #allocation2 [shape = 'u8[1024]{0}', space=vmem, size = 0x400, scoped, tag = 'output window, operand 0, single buffered']
    #allocation3 [shape = 's32[1]{0}', space=sflag, size = 0x4, scoped, tag = 'scoped memory for tpu_custom_call.1']
    %8 = vsyncpa [#allocation3], 0
    // Predicated region
    $region2: #{tpu_custom_call.1} parent=1 // pred_check
      _
    $region3: #{tpu_custom_call.1} parent=1 // pred_check_branch
      %10 = sbr.rel (0) target = $region5
    $region4: #{tpu_custom_call.1} parent=1 // pred_region
      _
    $region5: #{tpu_custom_call.1} parent=1 // pred_fallthru
      _
    // Predicated region
    $region6: #{tpu_custom_call.1} parent=1 // pred_check
      _
    $region7: #{tpu_custom_call.1} parent=1 // pred_check_branch
      %12 = sbr.rel (0) target = $region9
    $region8: #{tpu_custom_call.1} parent=1 // pred_region
      _
    $region9: #{tpu_custom_call.1} parent=1 // pred_fallthru
      _
    // Predicated region
    $region10: #{tpu_custom_call.1} parent=1 // pred_check
      _
    $region11: #{tpu_custom_call.1} parent=1 // pred_check_branch
      %14 = sbr.rel (0) target = $region13
    $region12: #{tpu_custom_call.1} parent=1 // pred_region
      _
    $region13: #{tpu_custom_call.1} parent=1 // pred_fallthru
      _
    %v15 = vld [vmem:[%s2] sm:$0x3]
    %17 = vset.pattern.permute.xlu0 0
    %18 = vperm.xlu0 %17, %v15
    %v19 = vpop.permute.xlu0 %18
    %v21 = vld [vmem:[%s1] sm:$0x3]
    %v22 = vld [vmem:[%s0] sm:$0x1]
    %24 = vset.pattern.permute.xlu0 0
    %25 = vperm.xlu0 %24, %v21
    %v26 = vpop.permute.xlu0 %25
    %v28 = vlaneseq
    %v29 = vshrl.u32 %v28, 7
    %v30 = vsub.s32 0, %v29
    %v31 = vrot.slane %v22, %v30
    %v32 = vmul.f32 %v26, %v31
    %v33 = vadd.f32 %v19, %v32
    %v34 = vld [vmem:[%s0 + $0x1] sm:$0x1]
    %35 = vset.pattern.permute.xlu0 1
    %36 = vperm.xlu0 %35, %v21
    %v37 = vpop.permute.xlu0 %36
    %v39 = vlaneseq
    %v40 = vshrl.u32 %v39, 7
    %v41 = vsub.s32 0, %v40
    %v42 = vrot.slane %v34, %v41
    %v43 = vmul.f32 %v37, %v42
    %v44 = vadd.f32 %v33, %v43
    %45 = vst [vmem:[#allocation2] sm:$0x3] %v44
    // Predicated region
    $region14: #{tpu_custom_call.1} parent=1 // pred_check
      _
    $region15: #{tpu_custom_call.1} parent=1 // pred_check_branch
      %47 = sbr.rel (0) target = $region17
    $region16: #{tpu_custom_call.1} parent=1 // pred_region
      %s49 = ssub.s32 32, 32
      %50 = vsyncadd [#allocation3], %s49
      %s52 = sshll.u32 [#allocation2], 4
      %s53 = int_to_ptr.vmem [resolvable:$true] %s52
      %55 = dma.vmem_to_hbm [thread:$0]  %s53, 32, %s3, [#allocation3]
    $region17: #{tpu_custom_call.1} parent=1 // pred_fallthru
      _
    // Predicated region
    $region18: #{tpu_custom_call.1} parent=1 // pred_check
      _
    $region19: #{tpu_custom_call.1} parent=1 // pred_check_branch
      %57 = sbr.rel (0) target = $region21
    $region20: #{tpu_custom_call.1} parent=1 // pred_region
      %58 = dma.done [#allocation3], 32
    $region21: #{tpu_custom_call.1} parent=1 // pred_fallthru
      _
    %59 = vsyncpa [#allocation3], 1

</llo_original>
